<compile_context>
chip_gen: v7x
topology: tpu7x:2x2x1
jax: 0.10.0
libtpu: 0.0.40
codegen_flags: <defaults>
</compile_context>

<pallas_src>
import functools

import jax
import jax.numpy as jnp
import numpy as np
from jax.experimental import pallas as pl
from jax.experimental.pallas import tpu as pltpu


def _round_up(x, m):
    return (x + m - 1) // m * m


def _fclstm_kernel(x_ref, h_ref, c_ref,
                   we_ref, be_ref,
                   wih_ref, whh_ref, bg_ref,
                   whead_ref, bhead_ref,
                   head_ref, hout_ref, cout_ref):
    H = whh_ref.shape[0]
    cdt = we_ref.dtype  # compute dtype for MXU inputs (fp32 or bf16)

    # Fused block-diagonal embedding matmul + ReLU.
    # x_ref = [vobs | tobs] (zero-padded lanes), result = cat([ve, te]).
    x = jnp.maximum(
        jnp.dot(x_ref[...].astype(cdt), we_ref[...],
                preferred_element_type=jnp.float32) + be_ref[...], 0.0)

    # LSTMCell gates: x @ W_ih + h @ W_hh + (b_ih + b_hh)   -> [TB, 4H]
    gates = (jnp.dot(x.astype(cdt), wih_ref[...],
                     preferred_element_type=jnp.float32)
             + jnp.dot(h_ref[...].astype(cdt), whh_ref[...],
                       preferred_element_type=jnp.float32)
             + bg_ref[...])

    # PyTorch LSTMCell gate order: input, forget, cell(g), output.
    i_g = jax.nn.sigmoid(gates[:, 0 * H:1 * H])
    f_g = jax.nn.sigmoid(gates[:, 1 * H:2 * H])
    g_g = jnp.tanh(gates[:, 2 * H:3 * H])
    o_g = jax.nn.sigmoid(gates[:, 3 * H:4 * H])

    c_new = f_g * c_ref[...] + i_g * g_g
    h_new = o_g * jnp.tanh(c_new)

    cout_ref[...] = c_new.astype(cout_ref.dtype)
    hout_ref[...] = h_new.astype(hout_ref.dtype)

    # Fused actor+critic head: one lane-dense [TB, HEAD_W>=128] matmul.
    head_ref[...] = (jnp.dot(h_new.astype(cdt), whead_ref[...],
                             preferred_element_type=jnp.float32)
                     + bhead_ref[...])


@functools.partial(jax.jit, static_argnames=("action_sz", "block_b"))
def fclstm_forward(vobs, tobs, h0, c0, kp, *, action_sz, block_b=128):
    """Fused FcLstmModel forward. Returns dict(policy, value, hidden=(h, c))."""
    B = vobs.shape[0]
    Din_p, E2 = kp["we"].shape          # padded input feats, vobs_embed+tobs_embed
    H = kp["whh"].shape[0]
    HEAD_W = kp["whead"].shape[1]

    # Concatenate the two observation vectors and pad feature axis to 128 lanes.
    x_in = jnp.concatenate([vobs, tobs], axis=1).astype(jnp.float32)
    x_in = jnp.pad(x_in, ((0, 0), (0, Din_p - x_in.shape[1])))

    # Batch tile: multiple of 8 sublanes; pad batch so the grid divides evenly.
    tb = min(block_b, _round_up(B, 8))
    Bp = _round_up(B, tb)
    if Bp != B:
        pad = ((0, Bp - B), (0, 0))
        x_in = jnp.pad(x_in, pad)
        h0p = jnp.pad(h0.astype(jnp.float32), pad)
        c0p = jnp.pad(c0.astype(jnp.float32), pad)
    else:
        h0p = h0.astype(jnp.float32)
        c0p = c0.astype(jnp.float32)

    grid = (Bp // tb,)

    def act_spec(feat):
        return pl.BlockSpec((tb, feat), lambda i: (i, 0))

    def w_spec(r, c):
        # Weights / biases stay VMEM-resident across batch tiles.
        return pl.BlockSpec((r, c), lambda i: (0, 0))

    flops = 2 * Bp * (Din_p * E2 + E2 * 4 * H + H * 4 * H + H * HEAD_W)
    bytes_accessed = 4 * (kp["we"].size + kp["wih"].size + kp["whh"].size
                          + kp["whead"].size
                          + Bp * (Din_p + 4 * H + HEAD_W))
    cost = pl.CostEstimate(flops=flops,
                           transcendentals=5 * Bp * H,      # 3 sigmoid + 2 tanh
                           bytes_accessed=bytes_accessed)

    head, h_new, c_new = pl.pallas_call(
        _fclstm_kernel,
        out_shape=(jax.ShapeDtypeStruct((Bp, HEAD_W), jnp.float32),
                   jax.ShapeDtypeStruct((Bp, H), jnp.float32),
                   jax.ShapeDtypeStruct((Bp, H), jnp.float32)),
        grid=grid,
        in_specs=[act_spec(Din_p), act_spec(H), act_spec(H),
                  w_spec(Din_p, E2), w_spec(1, E2),
                  w_spec(E2, 4 * H), w_spec(H, 4 * H), w_spec(1, 4 * H),
                  w_spec(H, HEAD_W), w_spec(1, HEAD_W)],
        out_specs=(act_spec(HEAD_W), act_spec(H), act_spec(H)),
        compiler_params=pltpu.CompilerParams(
            dimension_semantics=("parallel",)),
        cost_estimate=cost,
    )(x_in, h0p, c0p,
      kp["we"], kp["be"], kp["wih"], kp["whh"], kp["bg"],
      kp["whead"], kp["bhead"])

    policy = head[:B, :action_sz]
    value = head[:B, action_sz:action_sz + 1]
    return {"policy": policy, "value": value,
            "hidden": (h_new[:B], c_new[:B])}


def init_params(key, *, action_sz, vobs_sz, tobs_sz,
                tobs_embed_sz=512, vobs_embed_sz=512, infer_sz=512):
    """Logical (PyTorch-equivalent) parameters, weights stored [in, out]."""
    ks = jax.random.split(key, 8)

    def uniform(k, shape, scale):
        return jax.random.uniform(k, shape, jnp.float32, -scale, scale)

    def linear(kw, fan_in, fan_out):
        return uniform(kw, (fan_in, fan_out), 1.0 / np.sqrt(fan_in))

    wv = linear(ks[0], vobs_sz, vobs_embed_sz)
    bv = jnp.zeros((1, vobs_embed_sz), jnp.float32)
    wt = linear(ks[1], tobs_sz, tobs_embed_sz)
    bt = jnp.zeros((1, tobs_embed_sz), jnp.float32)

    H = infer_sz
    in_sz = vobs_embed_sz + tobs_embed_sz
    s = 1.0 / np.sqrt(H)
    wih = uniform(ks[2], (in_sz, 4 * H), s)    # LSTMCell weight_ih^T
    whh = uniform(ks[3], (H, 4 * H), s)        # LSTMCell weight_hh^T
    b_ih = uniform(ks[4], (1, 4 * H), s)
    b_hh = uniform(ks[5], (1, 4 * H), s)

    def norm_col(kw, fan_in, fan_out, std):
        w = jax.random.normal(kw, (fan_in, fan_out), jnp.float32)
        return w * std / jnp.sqrt(jnp.sum(w * w, axis=0, keepdims=True))

    wa = norm_col(ks[6], H, action_sz, 0.01)
    ba = jnp.zeros((1, action_sz), jnp.float32)
    wc = norm_col(ks[7], H, 1, 1.0)
    bc = jnp.zeros((1, 1), jnp.float32)

    return dict(wv=wv, bv=bv, wt=wt, bt=bt,
                wih=wih, whh=whh, b_ih=b_ih, b_hh=b_hh,
                wa=wa, ba=ba, wc=wc, bc=bc)


def pack_params(p, *, compute_dtype=jnp.float32):
    """One-time host-side packing: block-diag embed fusion, lane-dense head."""
    vobs_sz, Ve = p["wv"].shape
    tobs_sz, Te = p["wt"].shape
    H = p["whh"].shape[0]
    A = p["wa"].shape[1]

    Din = vobs_sz + tobs_sz
    Din_p = _round_up(Din, 128)
    # cat([vobs, tobs]) @ we == cat([relu-pre ve, te]); padded rows are zero.
    we = jnp.zeros((Din_p, Ve + Te), jnp.float32)
    we = we.at[:vobs_sz, :Ve].set(p["wv"])
    we = we.at[vobs_sz:Din, Ve:].set(p["wt"])
    be = jnp.concatenate([p["bv"], p["bt"]], axis=1)

    bg = p["b_ih"] + p["b_hh"]

    HEAD_W = _round_up(A + 1, 128)             # policy cols, then value col, zero pad
    whead = jnp.zeros((H, HEAD_W), jnp.float32)
    whead = whead.at[:, :A].set(p["wa"])
    whead = whead.at[:, A:A + 1].set(p["wc"])
    bhead = jnp.zeros((1, HEAD_W), jnp.float32)
    bhead = bhead.at[:, :A].set(p["ba"])
    bhead = bhead.at[:, A:A + 1].set(p["bc"])

    cdt = compute_dtype
    return dict(we=we.astype(cdt), be=be,
                wih=p["wih"].astype(cdt), whh=p["whh"].astype(cdt), bg=bg,
                whead=whead.astype(cdt), bhead=bhead)


def reference_forward(vobs, tobs, h0, c0, p):
    """Pure-JAX reference matching the PyTorch module (mode=1, LSTMCell)."""
    ve = jnp.maximum(vobs @ p["wv"] + p["bv"], 0.0)
    te = jnp.maximum(tobs @ p["wt"] + p["bt"], 0.0)
    x = jnp.concatenate([ve, te], axis=1)
    H = h0.shape[1]
    gates = x @ p["wih"] + h0 @ p["whh"] + p["b_ih"] + p["b_hh"]
    i = jax.nn.sigmoid(gates[:, :H])
    f = jax.nn.sigmoid(gates[:, H:2 * H])
    g = jnp.tanh(gates[:, 2 * H:3 * H])
    o = jax.nn.sigmoid(gates[:, 3 * H:4 * H])
    c = f * c0 + i * g
    h = o * jnp.tanh(c)
    return h @ p["wa"] + p["ba"], h @ p["wc"] + p["bc"], h, c


if __name__ == "__main__":
    # Small shapes consistent with FcLstmModel (fc=2048, glove=300, hidden=512
    # in the real model; scaled down here, incl. a non-128-multiple tobs_sz).
    B = 8
    action_sz = 6
    vobs_sz = 256
    tobs_sz = 96
    embed_sz = 128
    hidden_sz = 128

    key = jax.random.PRNGKey(0)
    kv, kt, kh, kc, kp = jax.random.split(key, 5)
    vobs = jax.random.normal(kv, (B, vobs_sz), jnp.float32)     # model_input['fc']
    tobs = jax.random.normal(kt, (B, tobs_sz), jnp.float32)     # model_input['glove']
    h0 = jax.random.normal(kh, (B, hidden_sz), jnp.float32) * 0.1
    c0 = jax.random.normal(kc, (B, hidden_sz), jnp.float32) * 0.1

    params = init_params(kp, action_sz=action_sz, vobs_sz=vobs_sz,
                         tobs_sz=tobs_sz, tobs_embed_sz=embed_sz,
                         vobs_embed_sz=embed_sz, infer_sz=hidden_sz)
    # Pack once (amortized across calls). Use compute_dtype=jnp.bfloat16 for
    # MXU-filling batch sizes on v6e/v7x.
    packed = pack_params(params, compute_dtype=jnp.float32)

    out = fclstm_forward(vobs, tobs, h0, c0, packed, action_sz=action_sz)
    jax.block_until_ready(out)

    ref_p, ref_v, ref_h, ref_c = reference_forward(vobs, tobs, h0, c0, params)
    np.testing.assert_allclose(np.asarray(out["policy"]), np.asarray(ref_p),
                               rtol=1e-4, atol=1e-4)
    np.testing.assert_allclose(np.asarray(out["value"]), np.asarray(ref_v),
                               rtol=1e-4, atol=1e-4)
    np.testing.assert_allclose(np.asarray(out["hidden"][0]), np.asarray(ref_h),
                               rtol=1e-4, atol=1e-4)
    np.testing.assert_allclose(np.asarray(out["hidden"][1]), np.asarray(ref_c),
                               rtol=1e-4, atol=1e-4)

    print("KERNEL_OK")
</pallas_src>

<mosaic_0001>
module attributes {stable_mosaic.version = 11 : i64} {
  func.func @_fclstm_kernel(%arg0: i32, %arg1: memref<8x384xf32, #tpu.memory_space<vmem>>, %arg2: memref<8x128xf32, #tpu.memory_space<vmem>>, %arg3: memref<8x128xf32, #tpu.memory_space<vmem>>, %arg4: memref<384x256xf32, #tpu.memory_space<vmem>>, %arg5: memref<1x256xf32, #tpu.memory_space<vmem>>, %arg6: memref<256x512xf32, #tpu.memory_space<vmem>>, %arg7: memref<128x512xf32, #tpu.memory_space<vmem>>, %arg8: memref<1x512xf32, #tpu.memory_space<vmem>>, %arg9: memref<128x128xf32, #tpu.memory_space<vmem>>, %arg10: memref<1x128xf32, #tpu.memory_space<vmem>>, %arg11: memref<8x128xf32, #tpu.memory_space<vmem>>, %arg12: memref<8x128xf32, #tpu.memory_space<vmem>>, %arg13: memref<8x128xf32, #tpu.memory_space<vmem>>) attributes {dimension_semantics = [#tpu.dimension_semantics<parallel>], iteration_bounds = array<i64: 1>, scalar_prefetch = 0 : i64, scratch_operands = 0 : i64, tpu.core_type = #tpu.core_type<tc>, window_params = [{transform_indices = @transform_0, window_bounds = array<i64: 8, 384>}, {transform_indices = @transform_1, window_bounds = array<i64: 8, 128>}, {transform_indices = @transform_2, window_bounds = array<i64: 8, 128>}, {pipeline_mode = #tpu.pipeline_mode<synchronous>, transform_indices = @transform_3, window_bounds = array<i64: 384, 256>}, {pipeline_mode = #tpu.pipeline_mode<synchronous>, transform_indices = @transform_4, window_bounds = array<i64: 1, 256>}, {pipeline_mode = #tpu.pipeline_mode<synchronous>, transform_indices = @transform_5, window_bounds = array<i64: 256, 512>}, {pipeline_mode = #tpu.pipeline_mode<synchronous>, transform_indices = @transform_6, window_bounds = array<i64: 128, 512>}, {pipeline_mode = #tpu.pipeline_mode<synchronous>, transform_indices = @transform_7, window_bounds = array<i64: 1, 512>}, {pipeline_mode = #tpu.pipeline_mode<synchronous>, transform_indices = @transform_8, window_bounds = array<i64: 128, 128>}, {pipeline_mode = #tpu.pipeline_mode<synchronous>, transform_indices = @transform_9, window_bounds = array<i64: 1, 128>}, {transform_indices = @transform_10, window_bounds = array<i64: 8, 128>}, {transform_indices = @transform_11, window_bounds = array<i64: 8, 128>}, {transform_indices = @transform_12, window_bounds = array<i64: 8, 128>}]} {
    %c0 = arith.constant 0 : index
    %c0_0 = arith.constant 0 : index
    %0 = vector.load %arg1[%c0, %c0_0] : memref<8x384xf32, #tpu.memory_space<vmem>>, vector<8x384xf32>
    %c0_1 = arith.constant 0 : index
    %c0_2 = arith.constant 0 : index
    %1 = vector.load %arg4[%c0_1, %c0_2] : memref<384x256xf32, #tpu.memory_space<vmem>>, vector<384x256xf32>
    %cst = arith.constant dense<0.000000e+00> : vector<8x256xf32>
    %2 = tpu.matmul %0, %1, %cst {dimension_numbers = #tpu.dot_dimension_numbers<[1], [0], [0], [1], [0, 0, 1, 1], [], []>} : vector<8x384xf32>, vector<384x256xf32>, vector<8x256xf32> -> vector<8x256xf32>
    %c0_3 = arith.constant 0 : index
    %c0_4 = arith.constant 0 : index
    %3 = vector.load %arg5[%c0_3, %c0_4] : memref<1x256xf32, #tpu.memory_space<vmem>>, vector<1x256xf32>
    %4 = vector.broadcast %3 : vector<1x256xf32> to vector<8x256xf32>
    %5 = arith.addf %2, %4 : vector<8x256xf32>
    %cst_5 = arith.constant 0.000000e+00 : f32
    %6 = vector.broadcast %cst_5 : f32 to vector<8x256xf32>
    %7 = arith.maximumf %5, %6 : vector<8x256xf32>
    %c0_6 = arith.constant 0 : index
    %c0_7 = arith.constant 0 : index
    %8 = vector.load %arg6[%c0_6, %c0_7] : memref<256x512xf32, #tpu.memory_space<vmem>>, vector<256x512xf32>
    %cst_8 = arith.constant dense<0.000000e+00> : vector<8x512xf32>
    %9 = tpu.matmul %7, %8, %cst_8 {dimension_numbers = #tpu.dot_dimension_numbers<[1], [0], [0], [1], [0, 0, 1, 1], [], []>} : vector<8x256xf32>, vector<256x512xf32>, vector<8x512xf32> -> vector<8x512xf32>
    %c0_9 = arith.constant 0 : index
    %c0_10 = arith.constant 0 : index
    %10 = vector.load %arg2[%c0_9, %c0_10] : memref<8x128xf32, #tpu.memory_space<vmem>>, vector<8x128xf32>
    %c0_11 = arith.constant 0 : index
    %c0_12 = arith.constant 0 : index
    %11 = vector.load %arg7[%c0_11, %c0_12] : memref<128x512xf32, #tpu.memory_space<vmem>>, vector<128x512xf32>
    %cst_13 = arith.constant dense<0.000000e+00> : vector<8x512xf32>
    %12 = tpu.matmul %10, %11, %cst_13 {dimension_numbers = #tpu.dot_dimension_numbers<[1], [0], [0], [1], [0, 0, 1, 1], [], []>} : vector<8x128xf32>, vector<128x512xf32>, vector<8x512xf32> -> vector<8x512xf32>
    %13 = arith.addf %9, %12 : vector<8x512xf32>
    %c0_14 = arith.constant 0 : index
    %c0_15 = arith.constant 0 : index
    %14 = vector.load %arg8[%c0_14, %c0_15] : memref<1x512xf32, #tpu.memory_space<vmem>>, vector<1x512xf32>
    %15 = vector.broadcast %14 : vector<1x512xf32> to vector<8x512xf32>
    %16 = arith.addf %13, %15 : vector<8x512xf32>
    %17 = vector.extract_strided_slice %16 {offsets = [0, 0], sizes = [8, 128], strides = [1, 1]} : vector<8x512xf32> to vector<8x128xf32>
    %18 = arith.negf %17 : vector<8x128xf32>
    %19 = math.exp %18 : vector<8x128xf32>
    %cst_16 = arith.constant 1.000000e+00 : f32
    %20 = vector.broadcast %cst_16 : f32 to vector<8x128xf32>
    %21 = arith.addf %20, %19 : vector<8x128xf32>
    %22 = arith.divf %20, %21 : vector<8x128xf32>
    %23 = vector.extract_strided_slice %16 {offsets = [0, 128], sizes = [8, 128], strides = [1, 1]} : vector<8x512xf32> to vector<8x128xf32>
    %24 = arith.negf %23 : vector<8x128xf32>
    %25 = math.exp %24 : vector<8x128xf32>
    %cst_17 = arith.constant 1.000000e+00 : f32
    %26 = vector.broadcast %cst_17 : f32 to vector<8x128xf32>
    %27 = arith.addf %26, %25 : vector<8x128xf32>
    %28 = arith.divf %26, %27 : vector<8x128xf32>
    %29 = vector.extract_strided_slice %16 {offsets = [0, 256], sizes = [8, 128], strides = [1, 1]} : vector<8x512xf32> to vector<8x128xf32>
    %30 = math.tanh %29 : vector<8x128xf32>
    %31 = vector.extract_strided_slice %16 {offsets = [0, 384], sizes = [8, 128], strides = [1, 1]} : vector<8x512xf32> to vector<8x128xf32>
    %32 = arith.negf %31 : vector<8x128xf32>
    %33 = math.exp %32 : vector<8x128xf32>
    %cst_18 = arith.constant 1.000000e+00 : f32
    %34 = vector.broadcast %cst_18 : f32 to vector<8x128xf32>
    %35 = arith.addf %34, %33 : vector<8x128xf32>
    %36 = arith.divf %34, %35 : vector<8x128xf32>
    %c0_19 = arith.constant 0 : index
    %c0_20 = arith.constant 0 : index
    %37 = vector.load %arg3[%c0_19, %c0_20] : memref<8x128xf32, #tpu.memory_space<vmem>>, vector<8x128xf32>
    %38 = arith.mulf %28, %37 : vector<8x128xf32>
    %39 = arith.mulf %22, %30 : vector<8x128xf32>
    %40 = arith.addf %38, %39 : vector<8x128xf32>
    %41 = math.tanh %40 : vector<8x128xf32>
    %42 = arith.mulf %36, %41 : vector<8x128xf32>
    %c0_21 = arith.constant 0 : index
    %c0_22 = arith.constant 0 : index
    %43 = vector.load %arg13[%c0_21, %c0_22] : memref<8x128xf32, #tpu.memory_space<vmem>>, vector<8x128xf32>
    tpu.vector_store %arg13[%c0_21, %c0_22], %40 {strides = array<i32>} : memref<8x128xf32, #tpu.memory_space<vmem>>, vector<8x128xf32>,
    %c0_23 = arith.constant 0 : index
    %c0_24 = arith.constant 0 : index
    %44 = vector.load %arg12[%c0_23, %c0_24] : memref<8x128xf32, #tpu.memory_space<vmem>>, vector<8x128xf32>
    tpu.vector_store %arg12[%c0_23, %c0_24], %42 {strides = array<i32>} : memref<8x128xf32, #tpu.memory_space<vmem>>, vector<8x128xf32>,
    %c0_25 = arith.constant 0 : index
    %c0_26 = arith.constant 0 : index
    %45 = vector.load %arg9[%c0_25, %c0_26] : memref<128x128xf32, #tpu.memory_space<vmem>>, vector<128x128xf32>
    %cst_27 = arith.constant dense<0.000000e+00> : vector<8x128xf32>
    %46 = tpu.matmul %42, %45, %cst_27 {dimension_numbers = #tpu.dot_dimension_numbers<[1], [0], [0], [1], [0, 0, 1, 1], [], []>} : vector<8x128xf32>, vector<128x128xf32>, vector<8x128xf32> -> vector<8x128xf32>
    %c0_28 = arith.constant 0 : index
    %c0_29 = arith.constant 0 : index
    %47 = vector.load %arg10[%c0_28, %c0_29] : memref<1x128xf32, #tpu.memory_space<vmem>>, vector<1x128xf32>
    %48 = vector.broadcast %47 : vector<1x128xf32> to vector<8x128xf32>
    %49 = arith.addf %46, %48 : vector<8x128xf32>
    %c0_30 = arith.constant 0 : index
    %c0_31 = arith.constant 0 : index
    %50 = vector.load %arg11[%c0_30, %c0_31] : memref<8x128xf32, #tpu.memory_space<vmem>>, vector<8x128xf32>
    tpu.vector_store %arg11[%c0_30, %c0_31], %49 {strides = array<i32>} : memref<8x128xf32, #tpu.memory_space<vmem>>, vector<8x128xf32>,
    return
  }
  func.func @transform_0(%arg0: i32) -> (i32, i32) {
    %c0_i32 = arith.constant 0 : i32
    %c0_i32_0 = arith.constant 0 : i32
    return %arg0, %c0_i32 : i32, i32
  }
  func.func @transform_1(%arg0: i32) -> (i32, i32) {
    %c0_i32 = arith.constant 0 : i32
    %c0_i32_0 = arith.constant 0 : i32
    return %arg0, %c0_i32 : i32, i32
  }
  func.func @transform_2(%arg0: i32) -> (i32, i32) {
    %c0_i32 = arith.constant 0 : i32
    %c0_i32_0 = arith.constant 0 : i32
    return %arg0, %c0_i32 : i32, i32
  }
  func.func @transform_3(%arg0: i32) -> (i32, i32) {
    %c0_i32 = arith.constant 0 : i32
    %c0_i32_0 = arith.constant 0 : i32
    %c0_i32_1 = arith.constant 0 : i32
    return %c0_i32, %c0_i32_0 : i32, i32
  }
  func.func @transform_4(%arg0: i32) -> (i32, i32) {
    %c0_i32 = arith.constant 0 : i32
    %c0_i32_0 = arith.constant 0 : i32
    %c0_i32_1 = arith.constant 0 : i32
    return %c0_i32, %c0_i32_0 : i32, i32
  }
  func.func @transform_5(%arg0: i32) -> (i32, i32) {
    %c0_i32 = arith.constant 0 : i32
    %c0_i32_0 = arith.constant 0 : i32
    %c0_i32_1 = arith.constant 0 : i32
    return %c0_i32, %c0_i32_0 : i32, i32
  }
  func.func @transform_6(%arg0: i32) -> (i32, i32) {
    %c0_i32 = arith.constant 0 : i32
    %c0_i32_0 = arith.constant 0 : i32
    %c0_i32_1 = arith.constant 0 : i32
    return %c0_i32, %c0_i32_0 : i32, i32
  }
  func.func @transform_7(%arg0: i32) -> (i32, i32) {
    %c0_i32 = arith.constant 0 : i32
    %c0_i32_0 = arith.constant 0 : i32
    %c0_i32_1 = arith.constant 0 : i32
    return %c0_i32, %c0_i32_0 : i32, i32
  }
  func.func @transform_8(%arg0: i32) -> (i32, i32) {
    %c0_i32 = arith.constant 0 : i32
    %c0_i32_0 = arith.constant 0 : i32
    %c0_i32_1 = arith.constant 0 : i32
    return %c0_i32, %c0_i32_0 : i32, i32
  }
  func.func @transform_9(%arg0: i32) -> (i32, i32) {
    %c0_i32 = arith.constant 0 : i32
    %c0_i32_0 = arith.constant 0 : i32
    %c0_i32_1 = arith.constant 0 : i32
    return %c0_i32, %c0_i32_0 : i32, i32
  }
  func.func @transform_10(%arg0: i32) -> (i32, i32) {
    %c0_i32 = arith.constant 0 : i32
    %c0_i32_0 = arith.constant 0 : i32
    return %arg0, %c0_i32 : i32, i32
  }
  func.func @transform_11(%arg0: i32) -> (i32, i32) {
    %c0_i32 = arith.constant 0 : i32
    %c0_i32_0 = arith.constant 0 : i32
    return %arg0, %c0_i32 : i32, i32
  }
  func.func @transform_12(%arg0: i32) -> (i32, i32) {
    %c0_i32 = arith.constant 0 : i32
    %c0_i32_0 = arith.constant 0 : i32
    return %arg0, %c0_i32 : i32, i32
  }
}

</mosaic_0001>

<llo_original>
// kernel: fclstm_forward.1
$region0: #{fclstm_forward.1}
  #allocation0 [shape = 'u32[]', space=smem, size = 0x4, offset = 0x4, fixed_abs, tag = 'smem constant byte address 0x4 - core index']
  #allocation1 [shape = 'u32[144,128]{1,0:T(1,128)}', space=vmem, size = 0x12000, scoped, tag = 'internal scratch']
  %s0 = inlined_call_operand.vmem [shape: f32[8,384], index: 0, kind: input, shape index: {}]
  %s1 = inlined_call_operand.vmem [shape: f32[8,128], index: 1, kind: input, shape index: {}]
  %s2 = inlined_call_operand.vmem [shape: f32[8,128], index: 2, kind: input, shape index: {}]
  %s3 = inlined_call_operand.hbm [shape: f32[384,256], index: 3, kind: input, shape index: {}]
  %s4 = inlined_call_operand.vmem [shape: f32[1,256], index: 4, kind: input, shape index: {}]
  %s5 = inlined_call_operand.hbm [shape: f32[256,512], index: 5, kind: input, shape index: {}]
  %s6 = inlined_call_operand.hbm [shape: f32[128,512], index: 6, kind: input, shape index: {}]
  %s7 = inlined_call_operand.vmem [shape: f32[1,512], index: 7, kind: input, shape index: {}]
  %s8 = inlined_call_operand.hbm [shape: f32[128,128], index: 8, kind: input, shape index: {}]
  %s9 = inlined_call_operand.vmem [shape: f32[1,128], index: 9, kind: input, shape index: {}]
  %s10 = inlined_call_operand.vmem [shape: f32[8,128], index: 10, kind: output, shape index: {0}]
  %s11 = inlined_call_operand.hbm [shape: f32[8,128], index: 11, kind: output, shape index: {1}]
  %s12 = inlined_call_operand.hbm [shape: f32[8,128], index: 12, kind: output, shape index: {2}]
  %13 = xla_tuple %s10, %s11, %s12
  %s14 = sld [smem:[#allocation0]]
  $region82: #{fclstm_forward.1} parent=0
    _
  %s16 = ssub.s32 1, %s14
  %s17 = scalar_select 0, %s16, %s14
  $region1: #{fclstm_forward.1} parent=0
    #allocation2 [shape = 'u8[393216]{0}', space=vmem, size = 0x60000, scoped, tag = 'input window, operand 3, single buffered']
    #allocation3 [shape = 's32[1]{0}', space=sflag, size = 0x4, scoped, tag = 'scoped memory for fclstm_forward.1']
    #allocation4 [shape = 's32[1]{0}', space=sflag, size = 0x4, scoped, tag = 'scoped memory for fclstm_forward.1']
    #allocation5 [shape = 'u8[524288]{0}', space=vmem, size = 0x80000, scoped, tag = 'input window, operand 5, single buffered']
    #allocation6 [shape = 's32[1]{0}', space=sflag, size = 0x4, scoped, tag = 'scoped memory for fclstm_forward.1']
    #allocation7 [shape = 'u8[262144]{0}', space=vmem, size = 0x40000, scoped, tag = 'input window, operand 6, single buffered']
    #allocation8 [shape = 'u8[65536]{0}', space=vmem, size = 0x10000, scoped, tag = 'input window, operand 8, single buffered']
    #allocation9 [shape = 's32[1]{0}', space=sflag, size = 0x4, scoped, tag = 'scoped memory for fclstm_forward.1']
    #allocation10 [shape = 'u8[4096]{0}', space=vmem, size = 0x1000, scoped, tag = 'output window, operand 1, single buffered']
    #allocation11 [shape = 'u8[4096]{0}', space=vmem, size = 0x1000, scoped, tag = 'output window, operand 2, single buffered']
    #allocation12 [shape = 's32[1]{0}', space=sflag, size = 0x4, scoped, tag = 'scoped memory for fclstm_forward.1']
    %18 = vsyncpa [#allocation3], 0
    %19 = vsyncpa [#allocation6], 0
    %20 = vsyncpa [#allocation9], 0
    %21 = vsyncpa [#allocation4], 0
    %22 = vsyncpa [#allocation12], 0
    // Predicated region
    $region2: #{fclstm_forward.1} parent=1 // pred_check
      _
    $region3: #{fclstm_forward.1} parent=1 // pred_check_branch
      %24 = sbr.rel (0) target = $region5
    $region4: #{fclstm_forward.1} parent=1 // pred_region
      _
    $region5: #{fclstm_forward.1} parent=1 // pred_fallthru
      _
    // Predicated region
    $region6: #{fclstm_forward.1} parent=1 // pred_check
      _
    $region7: #{fclstm_forward.1} parent=1 // pred_check_branch
      %26 = sbr.rel (0) target = $region9
    $region8: #{fclstm_forward.1} parent=1 // pred_region
      _
    $region9: #{fclstm_forward.1} parent=1 // pred_fallthru
      _
    // Predicated region
    $region10: #{fclstm_forward.1} parent=1 // pred_check
      _
    $region11: #{fclstm_forward.1} parent=1 // pred_check_branch
      %28 = sbr.rel (0) target = $region13
    $region12: #{fclstm_forward.1} parent=1 // pred_region
      _
    $region13: #{fclstm_forward.1} parent=1 // pred_fallthru
      _
    // Predicated region
    $region14: #{fclstm_forward.1} parent=1 // pred_check
      _
    $region15: #{fclstm_forward.1} parent=1 // pred_check_branch
      %30 = sbr.rel (0) target = $region17
    $region16: #{fclstm_forward.1} parent=1 // pred_region
      %s32 = ssub.s32 12288, 12288
      %33 = vsyncadd [#allocation3], %s32
      %s34 = sshll.u32 [#allocation2], 4
      %s35 = int_to_ptr.vmem [resolvable:$true] %s34
      %40 = dma.hbm_to_vmem [thread:$0]  %s3, 12288, %s35, [#allocation3], 256, 256, 16
    $region17: #{fclstm_forward.1} parent=1 // pred_fallthru
      _
    // Predicated region
    $region18: #{fclstm_forward.1} parent=1 // pred_check
      _
    $region19: #{fclstm_forward.1} parent=1 // pred_check_branch
      %42 = sbr.rel (0) target = $region21
    $region20: #{fclstm_forward.1} parent=1 // pred_region
      _
    $region21: #{fclstm_forward.1} parent=1 // pred_fallthru
      _
    // Predicated region
    $region22: #{fclstm_forward.1} parent=1 // pred_check
      _
    $region23: #{fclstm_forward.1} parent=1 // pred_check_branch
      %44 = sbr.rel (0) target = $region25
    $region24: #{fclstm_forward.1} parent=1 // pred_region
      %s46 = ssub.s32 16384, 16384
      %47 = vsyncadd [#allocation6], %s46
      %s48 = sshll.u32 [#allocation5], 4
      %s49 = int_to_ptr.vmem [resolvable:$true] %s48
      %54 = dma.hbm_to_vmem [thread:$0]  %s5, 16384, %s49, [#allocation6], 512, 512, 32
    $region25: #{fclstm_forward.1} parent=1 // pred_fallthru
      _
    // Predicated region
    $region26: #{fclstm_forward.1} parent=1 // pred_check
      _
    $region27: #{fclstm_forward.1} parent=1 // pred_check_branch
      %56 = sbr.rel (0) target = $region29
    $region28: #{fclstm_forward.1} parent=1 // pred_region
      %s58 = ssub.s32 8192, 8192
      %59 = vsyncadd [#allocation6], %s58
      %s60 = sshll.u32 [#allocation7], 4
      %s61 = int_to_ptr.vmem [resolvable:$true] %s60
      %66 = dma.hbm_to_vmem [thread:$0]  %s6, 8192, %s61, [#allocation6], 512, 512, 32
    $region29: #{fclstm_forward.1} parent=1 // pred_fallthru
      _
    // Predicated region
    $region30: #{fclstm_forward.1} parent=1 // pred_check
      _
    $region31: #{fclstm_forward.1} parent=1 // pred_check_branch
      %68 = sbr.rel (0) target = $region33
    $region32: #{fclstm_forward.1} parent=1 // pred_region
      _
    $region33: #{fclstm_forward.1} parent=1 // pred_fallthru
      _
    // Predicated region
    $region34: #{fclstm_forward.1} parent=1 // pred_check
      _
    $region35: #{fclstm_forward.1} parent=1 // pred_check_branch
      %70 = sbr.rel (0) target = $region37
    $region36: #{fclstm_forward.1} parent=1 // pred_region
      %s72 = ssub.s32 2048, 2048
      %73 = vsyncadd [#allocation9], %s72
      %s74 = sshll.u32 [#allocation8], 4
      %s75 = int_to_ptr.vmem [resolvable:$true] %s74
      %80 = dma.hbm_to_vmem [thread:$0]  %s8, 2048, %s75, [#allocation9], 128, 128, 8
    $region37: #{fclstm_forward.1} parent=1 // pred_fallthru
      _
    // Predicated region
    $region38: #{fclstm_forward.1} parent=1 // pred_check
      _
    $region39: #{fclstm_forward.1} parent=1 // pred_check_branch
      %82 = sbr.rel (0) target = $region41
    $region40: #{fclstm_forward.1} parent=1 // pred_region
      _
    $region41: #{fclstm_forward.1} parent=1 // pred_fallthru
      _
    // Predicated region
    $region42: #{fclstm_forward.1} parent=1 // pred_check
      _
    $region43: #{fclstm_forward.1} parent=1 // pred_check_branch
      %84 = sbr.rel (0) target = $region45
    $region44: #{fclstm_forward.1} parent=1 // pred_region
      %85 = dma.done [#allocation3], 12288
    $region45: #{fclstm_forward.1} parent=1 // pred_fallthru
      _
    // Predicated region
    $region46: #{fclstm_forward.1} parent=1 // pred_check
      _
    $region47: #{fclstm_forward.1} parent=1 // pred_check_branch
      %87 = sbr.rel (0) target = $region49
    $region48: #{fclstm_forward.1} parent=1 // pred_region
      %88 = dma.done [#allocation6], 16384
    $region49: #{fclstm_forward.1} parent=1 // pred_fallthru
      _
    // Predicated region
    $region50: #{fclstm_forward.1} parent=1 // pred_check
      _
    $region51: #{fclstm_forward.1} parent=1 // pred_check_branch
      %90 = sbr.rel (0) target = $region53
    $region52: #{fclstm_forward.1} parent=1 // pred_region
      %91 = dma.done [#allocation6], 8192
    $region53: #{fclstm_forward.1} parent=1 // pred_fallthru
      _
    // Predicated region
    $region54: #{fclstm_forward.1} parent=1 // pred_check
      _
    $region55: #{fclstm_forward.1} parent=1 // pred_check_branch
      %93 = sbr.rel (0) target = $region57
    $region56: #{fclstm_forward.1} parent=1 // pred_region
      %94 = dma.done [#allocation9], 2048
    $region57: #{fclstm_forward.1} parent=1 // pred_fallthru
      _
    %v95 = vld [vmem:[%s0] sm:$0xff]
    %v96 = vld [vmem:[%s0 + $0x8] sm:$0xff]
    %v97 = vld [vmem:[%s0 + $0x10] sm:$0xff]
    %v98 = vld [vmem:[#allocation2] sm:$0xff]
    %v99 = vld [vmem:[#allocation2 + $0x8] sm:$0xff]
    %v100 = vld [vmem:[#allocation2 + $0x10] sm:$0xff]
    %v101 = vld [vmem:[#allocation2 + $0x18] sm:$0xff]
    %v102 = vld [vmem:[#allocation2 + $0x20] sm:$0xff]
    %v103 = vld [vmem:[#allocation2 + $0x28] sm:$0xff]
    %v104 = vld [vmem:[#allocation2 + $0x30] sm:$0xff]
    %v105 = vld [vmem:[#allocation2 + $0x38] sm:$0xff]
    %v106 = vld [vmem:[#allocation2 + $0x40] sm:$0xff]
    %v107 = vld [vmem:[#allocation2 + $0x48] sm:$0xff]
    %v108 = vld [vmem:[#allocation2 + $0x50] sm:$0xff]
    %v109 = vld [vmem:[#allocation2 + $0x58] sm:$0xff]
    %v110 = vld [vmem:[#allocation2 + $0x60] sm:$0xff]
    %v111 = vld [vmem:[#allocation2 + $0x68] sm:$0xff]
    %v112 = vld [vmem:[#allocation2 + $0x70] sm:$0xff]
    %v113 = vld [vmem:[#allocation2 + $0x78] sm:$0xff]
    %v114 = vld [vmem:[#allocation2 + $0x80] sm:$0xff]
    %v115 = vld [vmem:[#allocation2 + $0x88] sm:$0xff]
    %v116 = vld [vmem:[#allocation2 + $0x90] sm:$0xff]
    %v117 = vld [vmem:[#allocation2 + $0x98] sm:$0xff]
    %v118 = vld [vmem:[#allocation2 + $0xa0] sm:$0xff]
    %v119 = vld [vmem:[#allocation2 + $0xa8] sm:$0xff]
    %v120 = vld [vmem:[#allocation2 + $0xb0] sm:$0xff]
    %v121 = vld [vmem:[#allocation2 + $0xb8] sm:$0xff]
    %v122 = vld [vmem:[#allocation2 + $0xc0] sm:$0xff]
    %v123 = vld [vmem:[#allocation2 + $0xc8] sm:$0xff]
    %v124 = vld [vmem:[#allocation2 + $0xd0] sm:$0xff]
    %v125 = vld [vmem:[#allocation2 + $0xd8] sm:$0xff]
    %v126 = vld [vmem:[#allocation2 + $0xe0] sm:$0xff]
    %v127 = vld [vmem:[#allocation2 + $0xe8] sm:$0xff]
    %v128 = vld [vmem:[#allocation2 + $0xf0] sm:$0xff]
    %v129 = vld [vmem:[#allocation2 + $0xf8] sm:$0xff]
    %v130 = vld [vmem:[#allocation2 + $0x100] sm:$0xff]
    %v131 = vld [vmem:[#allocation2 + $0x108] sm:$0xff]
    %v132 = vld [vmem:[#allocation2 + $0x110] sm:$0xff]
    %v133 = vld [vmem:[#allocation2 + $0x118] sm:$0xff]
    %v134 = vld [vmem:[#allocation2 + $0x120] sm:$0xff]
    %v135 = vld [vmem:[#allocation2 + $0x128] sm:$0xff]
    %v136 = vld [vmem:[#allocation2 + $0x130] sm:$0xff]
    %v137 = vld [vmem:[#allocation2 + $0x138] sm:$0xff]
    %v138 = vld [vmem:[#allocation2 + $0x140] sm:$0xff]
    %v139 = vld [vmem:[#allocation2 + $0x148] sm:$0xff]
    %v140 = vld [vmem:[#allocation2 + $0x150] sm:$0xff]
    %v141 = vld [vmem:[#allocation2 + $0x158] sm:$0xff]
    %v142 = vld [vmem:[#allocation2 + $0x160] sm:$0xff]
    %v143 = vld [vmem:[#allocation2 + $0x168] sm:$0xff]
    %v144 = vld [vmem:[#allocation2 + $0x170] sm:$0xff]
    %v145 = vld [vmem:[#allocation2 + $0x178] sm:$0xff]
    %v146 = vld [vmem:[#allocation2 + $0x180] sm:$0xff]
    %v147 = vld [vmem:[#allocation2 + $0x188] sm:$0xff]
    %v148 = vld [vmem:[#allocation2 + $0x190] sm:$0xff]
    %v149 = vld [vmem:[#allocation2 + $0x198] sm:$0xff]
    %v150 = vld [vmem:[#allocation2 + $0x1a0] sm:$0xff]
    %v151 = vld [vmem:[#allocation2 + $0x1a8] sm:$0xff]
    %v152 = vld [vmem:[#allocation2 + $0x1b0] sm:$0xff]
    %v153 = vld [vmem:[#allocation2 + $0x1b8] sm:$0xff]
    %v154 = vld [vmem:[#allocation2 + $0x1c0] sm:$0xff]
    %v155 = vld [vmem:[#allocation2 + $0x1c8] sm:$0xff]
    %v156 = vld [vmem:[#allocation2 + $0x1d0] sm:$0xff]
    %v157 = vld [vmem:[#allocation2 + $0x1d8] sm:$0xff]
    %v158 = vld [vmem:[#allocation2 + $0x1e0] sm:$0xff]
    %v159 = vld [vmem:[#allocation2 + $0x1e8] sm:$0xff]
    %v160 = vld [vmem:[#allocation2 + $0x1f0] sm:$0xff]
    %v161 = vld [vmem:[#allocation2 + $0x1f8] sm:$0xff]
    %v162 = vld [vmem:[#allocation2 + $0x200] sm:$0xff]
    %v163 = vld [vmem:[#allocation2 + $0x208] sm:$0xff]
    %v164 = vld [vmem:[#allocation2 + $0x210] sm:$0xff]
    %v165 = vld [vmem:[#allocation2 + $0x218] sm:$0xff]
    %v166 = vld [vmem:[#allocation2 + $0x220] sm:$0xff]
    %v167 = vld [vmem:[#allocation2 + $0x228] sm:$0xff]
    %v168 = vld [vmem:[#allocation2 + $0x230] sm:$0xff]
    %v169 = vld [vmem:[#allocation2 + $0x238] sm:$0xff]
    %v170 = vld [vmem:[#allocation2 + $0x240] sm:$0xff]
    %v171 = vld [vmem:[#allocation2 + $0x248] sm:$0xff]
    %v172 = vld [vmem:[#allocation2 + $0x250] sm:$0xff]
    %v173 = vld [vmem:[#allocation2 + $0x258] sm:$0xff]
    %v174 = vld [vmem:[#allocation2 + $0x260] sm:$0xff]
    %v175 = vld [vmem:[#allocation2 + $0x268] sm:$0xff]
    %v176 = vld [vmem:[#allocation2 + $0x270] sm:$0xff]
    %v177 = vld [vmem:[#allocation2 + $0x278] sm:$0xff]
    %v178 = vld [vmem:[#allocation2 + $0x280] sm:$0xff]
    %v179 = vld [vmem:[#allocation2 + $0x288] sm:$0xff]
    %v180 = vld [vmem:[#allocation2 + $0x290] sm:$0xff]
    %v181 = vld [vmem:[#allocation2 + $0x298] sm:$0xff]
    %v182 = vld [vmem:[#allocation2 + $0x2a0] sm:$0xff]
    %v183 = vld [vmem:[#allocation2 + $0x2a8] sm:$0xff]
    %v184 = vld [vmem:[#allocation2 + $0x2b0] sm:$0xff]
    %v185 = vld [vmem:[#allocation2 + $0x2b8] sm:$0xff]
    %v186 = vld [vmem:[#allocation2 + $0x2c0] sm:$0xff]
    %v187 = vld [vmem:[#allocation2 + $0x2c8] sm:$0xff]
    %v188 = vld [vmem:[#allocation2 + $0x2d0] sm:$0xff]
    %v189 = vld [vmem:[#allocation2 + $0x2d8] sm:$0xff]
    %v190 = vld [vmem:[#allocation2 + $0x2e0] sm:$0xff]
    %v191 = vld [vmem:[#allocation2 + $0x2e8] sm:$0xff]
    %v192 = vld [vmem:[#allocation2 + $0x2f0] sm:$0xff]
    %v193 = vld [vmem:[#allocation2 + $0x2f8] sm:$0xff]
    %v194 = vld [vmem:[%s4] sm:$0x3]
    %v196 = vlaneseq
    %v197 = vshrl.u32 %v196, 7
    %v198 = vsub.s32 0, %v197
    %v199 = vrot.slane %v194, %v198
    %v200 = vlaneseq
    %v201 = vshrl.u32 %v200, 7
    %v202 = vsub.s32 1, %v201
    %v203 = vrot.slane %v194, %v202
    %206 = vmatprep.subr.mxu0 %v99
    %207 = vmatpush1.msra.mxu0 %v98
    %208 = vmatprep.subr.mxu0 %v101
    %209 = vmatpush1.msra.mxu0 %v100
    %210 = vmatprep.subr.mxu0 %v103
    %211 = vmatpush1.msra.mxu0 %v102
    %212 = vmatprep.subr.mxu0 %v105
    %213 = vmatpush1.msra.mxu0 %v104
    %214 = vmatprep.subr.mxu0 %v107
    %215 = vmatpush1.msra.mxu0 %v106
    %216 = vmatprep.subr.mxu0 %v109
    %217 = vmatpush1.msra.mxu0 %v108
    %218 = vmatprep.subr.mxu0 %v111
    %219 = vmatpush1.msra.mxu0 %v110
    %220 = vmatprep.subr.mxu0 %v113
    %221 = vmatpush1.msra.mxu0 %v112
    %222 = vmatprep.subr.mxu0 %v115
    %223 = vmatpush1.msra.mxu0 %v114
    %224 = vmatprep.subr.mxu0 %v117
    %225 = vmatpush1.msra.mxu0 %v116
    %226 = vmatprep.subr.mxu0 %v119
    %227 = vmatpush1.msra.mxu0 %v118
    %228 = vmatprep.subr.mxu0 %v121
    %229 = vmatpush1.msra.mxu0 %v120
    %230 = vmatprep.subr.mxu0 %v123
    %231 = vmatpush1.msra.mxu0 %v122
    %232 = vmatprep.subr.mxu0 %v125
    %233 = vmatpush1.msra.mxu0 %v124
    %234 = vmatprep.subr.mxu0 %v127
    %235 = vmatpush1.msra.mxu0 %v126
    %236 = vmatprep.subr.mxu0 %v129
    %237 = vmatpush1.msra.mxu0 %v128
    %238 = vmatprep.subr.mxu0 %v131
    %239 = vmatpush1.msra.mxu0 %v130
    %240 = vmatprep.subr.mxu0 %v133
    %241 = vmatpush1.msra.mxu0 %v132
    %242 = vmatprep.subr.mxu0 %v135
    %243 = vmatpush1.msra.mxu0 %v134
    %244 = vmatprep.subr.mxu0 %v137
    %245 = vmatpush1.msra.mxu0 %v136
    %246 = vmatprep.subr.mxu0 %v139
    %247 = vmatpush1.msra.mxu0 %v138
    %248 = vmatprep.subr.mxu0 %v141
    %249 = vmatpush1.msra.mxu0 %v140
    %250 = vmatprep.subr.mxu0 %v143
    %251 = vmatpush1.msra.mxu0 %v142
    %252 = vmatprep.subr.mxu0 %v145
    %253 = vmatpush1.msra.mxu0 %v144
    %254 = vmatprep.subr.mxu0 %v147
    %255 = vmatpush1.msra.mxu0 %v146
    %256 = vmatprep.subr.mxu0 %v149
    %257 = vmatpush1.msra.mxu0 %v148
    %258 = vmatprep.subr.mxu0 %v151
    %259 = vmatpush1.msra.mxu0 %v150
    %260 = vmatprep.subr.mxu0 %v153
    %261 = vmatpush1.msra.mxu0 %v152
    %262 = vmatprep.subr.mxu0 %v155
    %263 = vmatpush1.msra.mxu0 %v154
    %264 = vmatprep.subr.mxu0 %v157
    %265 = vmatpush1.msra.mxu0 %v156
    %266 = vmatprep.subr.mxu0 %v159
    %267 = vmatpush1.msra.mxu0 %v158
    %268 = vmatprep.subr.mxu0 %v161
    %269 = vmatpush1.msra.mxu0 %v160
    %270 = vmatprep.mubr.f32.mxu0 %v96
    %271 = vmatmul.mubr.f32.gmra.mrb[0].mxu0 %v95
    %v272 = vpop.f32.mrb[0].mxu0
    %v273 = vadd.f32 %v199, %v272
    %v274 = vpop.f32.mrb[0].mxu0
    %v275 = vadd.f32 %v203, %v274
    %276 = vdwg.mxu0
    %277 = vmatprep.subr.mxu0 %v163
    %278 = vmatpush1.msra.mxu0 %v162
    %279 = vmatprep.subr.mxu0 %v165
    %280 = vmatpush1.msra.mxu0 %v164
    %281 = vmatprep.subr.mxu0 %v167
    %282 = vmatpush1.msra.mxu0 %v166
    %283 = vmatprep.subr.mxu0 %v169
    %284 = vmatpush1.msra.mxu0 %v168
    %285 = vmatprep.subr.mxu0 %v171
    %286 = vmatpush1.msra.mxu0 %v170
    %287 = vmatprep.subr.mxu0 %v173
    %288 = vmatpush1.msra.mxu0 %v172
    %289 = vmatprep.subr.mxu0 %v175
    %290 = vmatpush1.msra.mxu0 %v174
    %291 = vmatprep.subr.mxu0 %v177
    %292 = vmatpush1.msra.mxu0 %v176
    %293 = vmatprep.subr.mxu0 %v179
    %294 = vmatpush1.msra.mxu0 %v178
    %295 = vmatprep.subr.mxu0 %v181
    %296 = vmatpush1.msra.mxu0 %v180
    %297 = vmatprep.subr.mxu0 %v183
    %298 = vmatpush1.msra.mxu0 %v182
    %299 = vmatprep.subr.mxu0 %v185
    %300 = vmatpush1.msra.mxu0 %v184
    %301 = vmatprep.subr.mxu0 %v187
    %302 = vmatpush1.msra.mxu0 %v186
    %303 = vmatprep.subr.mxu0 %v189
    %304 = vmatpush1.msra.mxu0 %v188
    %305 = vmatprep.subr.mxu0 %v191
    %306 = vmatpush1.msra.mxu0 %v190
    %307 = vmatprep.subr.mxu0 %v193
    %308 = vmatpush1.msra.mxu0 %v192
    %309 = vmatprep.subr.mxu0 0.0
    %310 = vmatpush1.msra.mxu0 0.0
    %311 = vmatprep.subr.mxu0 0.0
    %312 = vmatpush1.msra.mxu0 0.0
    %313 = vmatprep.subr.mxu0 0.0
    %314 = vmatpush1.msra.mxu0 0.0
    %315 = vmatprep.subr.mxu0 0.0
    %316 = vmatpush1.msra.mxu0 0.0
    %317 = vmatprep.subr.mxu0 0.0
    %318 = vmatpush1.msra.mxu0 0.0
    %319 = vmatprep.subr.mxu0 0.0
    %320 = vmatpush1.msra.mxu0 0.0
    %321 = vmatprep.subr.mxu0 0.0
    %322 = vmatpush1.msra.mxu0 0.0
    %323 = vmatprep.subr.mxu0 0.0
    %324 = vmatpush1.msra.mxu0 0.0
    %325 = vmatprep.subr.mxu0 0.0
    %326 = vmatpush1.msra.mxu0 0.0
    %327 = vmatprep.subr.mxu0 0.0
    %328 = vmatpush1.msra.mxu0 0.0
    %329 = vmatprep.subr.mxu0 0.0
    %330 = vmatpush1.msra.mxu0 0.0
    %331 = vmatprep.subr.mxu0 0.0
    %332 = vmatpush1.msra.mxu0 0.0
    %333 = vmatprep.subr.mxu0 0.0
    %334 = vmatpush1.msra.mxu0 0.0
    %335 = vmatprep.subr.mxu0 0.0
    %336 = vmatpush1.msra.mxu0 0.0
    %337 = vmatprep.subr.mxu0 0.0
    %338 = vmatpush1.msra.mxu0 0.0
    %339 = vmatprep.subr.mxu0 0.0
    %340 = vmatpush1.msra.mxu0 0.0
    %341 = vmatprep.mubr.f32.mxu0 0.0
    %342 = vmatmul.mubr.f32.gmra.mrb[0].mxu0 %v97
    %v343 = vpop.f32.mrb[0].mxu0
    %v344 = vadd.f32 %v273, %v343
    %v345 = vpop.f32.mrb[0].mxu0
    %v346 = vadd.f32 %v275, %v345
    %347 = vdwg.mxu0
    %v348 = vmax.f32 %v344, 0.0
    %v349 = vmax.f32 %v346, 0.0
    %v350 = vld [vmem:[#allocation5] sm:$0xff]
    %v351 = vld [vmem:[#allocation5 + $0x8] sm:$0xff]
    %v352 = vld [vmem:[#allocation5 + $0x10] sm:$0xff]
    %v353 = vld [vmem:[#allocation5 + $0x18] sm:$0xff]
    %v354 = vld [vmem:[#allocation5 + $0x20] sm:$0xff]
    %v355 = vld [vmem:[#allocation5 + $0x28] sm:$0xff]
    %v356 = vld [vmem:[#allocation5 + $0x30] sm:$0xff]
    %v357 = vld [vmem:[#allocation5 + $0x38] sm:$0xff]
    %v358 = vld [vmem:[#allocation5 + $0x40] sm:$0xff]
    %v359 = vld [vmem:[#allocation5 + $0x48] sm:$0xff]
    %v360 = vld [vmem:[#allocation5 + $0x50] sm:$0xff]
    %v361 = vld [vmem:[#allocation5 + $0x58] sm:$0xff]
    %v362 = vld [vmem:[#allocation5 + $0x60] sm:$0xff]
    %v363 = vld [vmem:[#allocation5 + $0x68] sm:$0xff]
    %v364 = vld [vmem:[#allocation5 + $0x70] sm:$0xff]
    %v365 = vld [vmem:[#allocation5 + $0x78] sm:$0xff]
    %v366 = vld [vmem:[#allocation5 + $0x80] sm:$0xff]
    %v367 = vld [vmem:[#allocation5 + $0x88] sm:$0xff]
    %v368 = vld [vmem:[#allocation5 + $0x90] sm:$0xff]
    %v369 = vld [vmem:[#allocation5 + $0x98] sm:$0xff]
    %v370 = vld [vmem:[#allocation5 + $0xa0] sm:$0xff]
    %v371 = vld [vmem:[#allocation5 + $0xa8] sm:$0xff]
    %v372 = vld [vmem:[#allocation5 + $0xb0] sm:$0xff]
    %v373 = vld [vmem:[#allocation5 + $0xb8] sm:$0xff]
    %v374 = vld [vmem:[#allocation5 + $0xc0] sm:$0xff]
    %v375 = vld [vmem:[#allocation5 + $0xc8] sm:$0xff]
    %v376 = vld [vmem:[#allocation5 + $0xd0] sm:$0xff]
    %v377 = vld [vmem:[#allocation5 + $0xd8] sm:$0xff]
    %v378 = vld [vmem:[#allocation5 + $0xe0] sm:$0xff]
    %v379 = vld [vmem:[#allocation5 + $0xe8] sm:$0xff]
    %v380 = vld [vmem:[#allocation5 + $0xf0] sm:$0xff]
    %v381 = vld [vmem:[#allocation5 + $0xf8] sm:$0xff]
    %v382 = vld [vmem:[#allocation5 + $0x100] sm:$0xff]
    %v383 = vld [vmem:[#allocation5 + $0x108] sm:$0xff]
    %v384 = vld [vmem:[#allocation5 + $0x110] sm:$0xff]
    %v385 = vld [vmem:[#allocation5 + $0x118] sm:$0xff]
    %v386 = vld [vmem:[#allocation5 + $0x120] sm:$0xff]
    %v387 = vld [vmem:[#allocation5 + $0x128] sm:$0xff]
    %v388 = vld [vmem:[#allocation5 + $0x130] sm:$0xff]
    %v389 = vld [vmem:[#allocation5 + $0x138] sm:$0xff]
    %v390 = vld [vmem:[#allocation5 + $0x140] sm:$0xff]
    %v391 = vld [vmem:[#allocation5 + $0x148] sm:$0xff]
    %v392 = vld [vmem:[#allocation5 + $0x150] sm:$0xff]
    %v393 = vld [vmem:[#allocation5 + $0x158] sm:$0xff]
    %v394 = vld [vmem:[#allocation5 + $0x160] sm:$0xff]
    %v395 = vld [vmem:[#allocation5 + $0x168] sm:$0xff]
    %v396 = vld [vmem:[#allocation5 + $0x170] sm:$0xff]
    %v397 = vld [vmem:[#allocation5 + $0x178] sm:$0xff]
    %v398 = vld [vmem:[#allocation5 + $0x180] sm:$0xff]
    %v399 = vld [vmem:[#allocation5 + $0x188] sm:$0xff]
    %v400 = vld [vmem:[#allocation5 + $0x190] sm:$0xff]
    %v401 = vld [vmem:[#allocation5 + $0x198] sm:$0xff]
    %v402 = vld [vmem:[#allocation5 + $0x1a0] sm:$0xff]
    %v403 = vld [vmem:[#allocation5 + $0x1a8] sm:$0xff]
    %v404 = vld [vmem:[#allocation5 + $0x1b0] sm:$0xff]
    %v405 = vld [vmem:[#allocation5 + $0x1b8] sm:$0xff]
    %v406 = vld [vmem:[#allocation5 + $0x1c0] sm:$0xff]
    %v407 = vld [vmem:[#allocation5 + $0x1c8] sm:$0xff]
    %v408 = vld [vmem:[#allocation5 + $0x1d0] sm:$0xff]
    %v409 = vld [vmem:[#allocation5 + $0x1d8] sm:$0xff]
    %v410 = vld [vmem:[#allocation5 + $0x1e0] sm:$0xff]
    %v411 = vld [vmem:[#allocation5 + $0x1e8] sm:$0xff]
    %v412 = vld [vmem:[#allocation5 + $0x1f0] sm:$0xff]
    %v413 = vld [vmem:[#allocation5 + $0x1f8] sm:$0xff]
    %v414 = vld [vmem:[#allocation5 + $0x200] sm:$0xff]
    %v415 = vld [vmem:[#allocation5 + $0x208] sm:$0xff]
    %v416 = vld [vmem:[#allocation5 + $0x210] sm:$0xff]
    %v417 = vld [vmem:[#allocation5 + $0x218] sm:$0xff]
    %v418 = vld [vmem:[#allocation5 + $0x220] sm:$0xff]
    %v419 = vld [vmem:[#allocation5 + $0x228] sm:$0xff]
    %v420 = vld [vmem:[#allocation5 + $0x230] sm:$0xff]
    %v421 = vld [vmem:[#allocation5 + $0x238] sm:$0xff]
    %v422 = vld [vmem:[#allocation5 + $0x240] sm:$0xff]
    %v423 = vld [vmem:[#allocation5 + $0x248] sm:$0xff]
    %v424 = vld [vmem:[#allocation5 + $0x250] sm:$0xff]
    %v425 = vld [vmem:[#allocation5 + $0x258] sm:$0xff]
    %v426 = vld [vmem:[#allocation5 + $0x260] sm:$0xff]
    %v427 = vld [vmem:[#allocation5 + $0x268] sm:$0xff]
    %v428 = vld [vmem:[#allocation5 + $0x270] sm:$0xff]
    %v429 = vld [vmem:[#allocation5 + $0x278] sm:$0xff]
    %v430 = vld [vmem:[#allocation5 + $0x280] sm:$0xff]
    %v431 = vld [vmem:[#allocation5 + $0x288] sm:$0xff]
    %v432 = vld [vmem:[#allocation5 + $0x290] sm:$0xff]
    %v433 = vld [vmem:[#allocation5 + $0x298] sm:$0xff]
    %v434 = vld [vmem:[#allocation5 + $0x2a0] sm:$0xff]
    %v435 = vld [vmem:[#allocation5 + $0x2a8] sm:$0xff]
    %v436 = vld [vmem:[#allocation5 + $0x2b0] sm:$0xff]
    %v437 = vld [vmem:[#allocation5 + $0x2b8] sm:$0xff]
    %v438 = vld [vmem:[#allocation5 + $0x2c0] sm:$0xff]
    %v439 = vld [vmem:[#allocation5 + $0x2c8] sm:$0xff]
    %v440 = vld [vmem:[#allocation5 + $0x2d0] sm:$0xff]
    %v441 = vld [vmem:[#allocation5 + $0x2d8] sm:$0xff]
    %v442 = vld [vmem:[#allocation5 + $0x2e0] sm:$0xff]
    %v443 = vld [vmem:[#allocation5 + $0x2e8] sm:$0xff]
    %v444 = vld [vmem:[#allocation5 + $0x2f0] sm:$0xff]
    %v445 = vld [vmem:[#allocation5 + $0x2f8] sm:$0xff]
    %v446 = vld [vmem:[#allocation5 + $0x300] sm:$0xff]
    %v447 = vld [vmem:[#allocation5 + $0x308] sm:$0xff]
    %v448 = vld [vmem:[#allocation5 + $0x310] sm:$0xff]
    %v449 = vld [vmem:[#allocation5 + $0x318] sm:$0xff]
    %v450 = vld [vmem:[#allocation5 + $0x320] sm:$0xff]
    %v451 = vld [vmem:[#allocation5 + $0x328] sm:$0xff]
    %v452 = vld [vmem:[#allocation5 + $0x330] sm:$0xff]
    %v453 = vld [vmem:[#allocation5 + $0x338] sm:$0xff]
    %v454 = vld [vmem:[#allocation5 + $0x340] sm:$0xff]
    %v455 = vld [vmem:[#allocation5 + $0x348] sm:$0xff]
    %v456 = vld [vmem:[#allocation5 + $0x350] sm:$0xff]
    %v457 = vld [vmem:[#allocation5 + $0x358] sm:$0xff]
    %v458 = vld [vmem:[#allocation5 + $0x360] sm:$0xff]
    %v459 = vld [vmem:[#allocation5 + $0x368] sm:$0xff]
    %v460 = vld [vmem:[#allocation5 + $0x370] sm:$0xff]
    %v461 = vld [vmem:[#allocation5 + $0x378] sm:$0xff]
    %v462 = vld [vmem:[#allocation5 + $0x380] sm:$0xff]
    %v463 = vld [vmem:[#allocation5 + $0x388] sm:$0xff]
    %v464 = vld [vmem:[#allocation5 + $0x390] sm:$0xff]
    %v465 = vld [vmem:[#allocation5 + $0x398] sm:$0xff]
    %v466 = vld [vmem:[#allocation5 + $0x3a0] sm:$0xff]
    %v467 = vld [vmem:[#allocation5 + $0x3a8] sm:$0xff]
    %v468 = vld [vmem:[#allocation5 + $0x3b0] sm:$0xff]
    %v469 = vld [vmem:[#allocation5 + $0x3b8] sm:$0xff]
    %v470 = vld [vmem:[#allocation5 + $0x3c0] sm:$0xff]
    %v471 = vld [vmem:[#allocation5 + $0x3c8] sm:$0xff]
    %v472 = vld [vmem:[#allocation5 + $0x3d0] sm:$0xff]
    %v473 = vld [vmem:[#allocation5 + $0x3d8] sm:$0xff]
    %v474 = vld [vmem:[#allocation5 + $0x3e0] sm:$0xff]
    %v475 = vld [vmem:[#allocation5 + $0x3e8] sm:$0xff]
    %v476 = vld [vmem:[#allocation5 + $0x3f0] sm:$0xff]
    %v477 = vld [vmem:[#allocation5 + $0x3f8] sm:$0xff]
    %v478 = vld [vmem:[%s1] sm:$0xff]
    %v479 = vld [vmem:[#allocation7] sm:$0xff]
    %v480 = vld [vmem:[#allocation7 + $0x8] sm:$0xff]
    %v481 = vld [vmem:[#allocation7 + $0x10] sm:$0xff]
    %v482 = vld [vmem:[#allocation7 + $0x18] sm:$0xff]
    %v483 = vld [vmem:[#allocation7 + $0x20] sm:$0xff]
    %v484 = vld [vmem:[#allocation7 + $0x28] sm:$0xff]
    %v485 = vld [vmem:[#allocation7 + $0x30] sm:$0xff]
    %v486 = vld [vmem:[#allocation7 + $0x38] sm:$0xff]
    %v487 = vld [vmem:[#allocation7 + $0x40] sm:$0xff]
    %v488 = vld [vmem:[#allocation7 + $0x48] sm:$0xff]
    %v489 = vld [vmem:[#allocation7 + $0x50] sm:$0xff]
    %v490 = vld [vmem:[#allocation7 + $0x58] sm:$0xff]
    %v491 = vld [vmem:[#allocation7 + $0x60] sm:$0xff]
    %v492 = vld [vmem:[#allocation7 + $0x68] sm:$0xff]
    %v493 = vld [vmem:[#allocation7 + $0x70] sm:$0xff]
    %v494 = vld [vmem:[#allocation7 + $0x78] sm:$0xff]
    %v495 = vld [vmem:[#allocation7 + $0x80] sm:$0xff]
    %v496 = vld [vmem:[#allocation7 + $0x88] sm:$0xff]
    %v497 = vld [vmem:[#allocation7 + $0x90] sm:$0xff]
    %v498 = vld [vmem:[#allocation7 + $0x98] sm:$0xff]
    %v499 = vld [vmem:[#allocation7 + $0xa0] sm:$0xff]
    %v500 = vld [vmem:[#allocation7 + $0xa8] sm:$0xff]
    %v501 = vld [vmem:[#allocation7 + $0xb0] sm:$0xff]
    %v502 = vld [vmem:[#allocation7 + $0xb8] sm:$0xff]
    %v503 = vld [vmem:[#allocation7 + $0xc0] sm:$0xff]
    %v504 = vld [vmem:[#allocation7 + $0xc8] sm:$0xff]
    %v505 = vld [vmem:[#allocation7 + $0xd0] sm:$0xff]
    %v506 = vld [vmem:[#allocation7 + $0xd8] sm:$0xff]
    %v507 = vld [vmem:[#allocation7 + $0xe0] sm:$0xff]
    %v508 = vld [vmem:[#allocation7 + $0xe8] sm:$0xff]
    %v509 = vld [vmem:[#allocation7 + $0xf0] sm:$0xff]
    %v510 = vld [vmem:[#allocation7 + $0xf8] sm:$0xff]
    %v511 = vld [vmem:[#allocation7 + $0x100] sm:$0xff]
    %v512 = vld [vmem:[#allocation7 + $0x108] sm:$0xff]
    %v513 = vld [vmem:[#allocation7 + $0x110] sm:$0xff]
    %v514 = vld [vmem:[#allocation7 + $0x118] sm:$0xff]
    %v515 = vld [vmem:[#allocation7 + $0x120] sm:$0xff]
    %v516 = vld [vmem:[#allocation7 + $0x128] sm:$0xff]
    %v517 = vld [vmem:[#allocation7 + $0x130] sm:$0xff]
    %v518 = vld [vmem:[#allocation7 + $0x138] sm:$0xff]
    %v519 = vld [vmem:[#allocation7 + $0x140] sm:$0xff]
    %v520 = vld [vmem:[#allocation7 + $0x148] sm:$0xff]
    %v521 = vld [vmem:[#allocation7 + $0x150] sm:$0xff]
    %v522 = vld [vmem:[#allocation7 + $0x158] sm:$0xff]
    %v523 = vld [vmem:[#allocation7 + $0x160] sm:$0xff]
    %v524 = vld [vmem:[#allocation7 + $0x168] sm:$0xff]
    %v525 = vld [vmem:[#allocation7 + $0x170] sm:$0xff]
    %v526 = vld [vmem:[#allocation7 + $0x178] sm:$0xff]
    %v527 = vld [vmem:[#allocation7 + $0x180] sm:$0xff]
    %v528 = vld [vmem:[#allocation7 + $0x188] sm:$0xff]
    %v529 = vld [vmem:[#allocation7 + $0x190] sm:$0xff]
    %v530 = vld [vmem:[#allocation7 + $0x198] sm:$0xff]
    %v531 = vld [vmem:[#allocation7 + $0x1a0] sm:$0xff]
    %v532 = vld [vmem:[#allocation7 + $0x1a8] sm:$0xff]
    %v533 = vld [vmem:[#allocation7 + $0x1b0] sm:$0xff]
    %v534 = vld [vmem:[#allocation7 + $0x1b8] sm:$0xff]
    %v535 = vld [vmem:[#allocation7 + $0x1c0] sm:$0xff]
    %v536 = vld [vmem:[#allocation7 + $0x1c8] sm:$0xff]
    %v537 = vld [vmem:[#allocation7 + $0x1d0] sm:$0xff]
    %v538 = vld [vmem:[#allocation7 + $0x1d8] sm:$0xff]
    %v539 = vld [vmem:[#allocation7 + $0x1e0] sm:$0xff]
    %v540 = vld [vmem:[#allocation7 + $0x1e8] sm:$0xff]
    %v541 = vld [vmem:[#allocation7 + $0x1f0] sm:$0xff]
    %v542 = vld [vmem:[#allocation7 + $0x1f8] sm:$0xff]
    %543 = vmatprep.subr.mxu0 %v480
    %544 = vmatpush1.msra.mxu0 %v479
    %545 = vmatprep.subr.mxu0 %v484
    %546 = vmatpush1.msra.mxu0 %v483
    %547 = vmatprep.subr.mxu0 %v488
    %548 = vmatpush1.msra.mxu0 %v487
    %549 = vmatprep.subr.mxu0 %v492
    %550 = vmatpush1.msra.mxu0 %v491
    %551 = vmatprep.subr.mxu0 %v496
    %552 = vmatpush1.msra.mxu0 %v495
    %553 = vmatprep.subr.mxu0 %v500
    %554 = vmatpush1.msra.mxu0 %v499
    %555 = vmatprep.subr.mxu0 %v504
    %556 = vmatpush1.msra.mxu0 %v503
    %557 = vmatprep.subr.mxu0 %v508
    %558 = vmatpush1.msra.mxu0 %v507
    %559 = vmatprep.subr.mxu0 %v512
    %560 = vmatpush1.msra.mxu0 %v511
    %561 = vmatprep.subr.mxu0 %v516
    %562 = vmatpush1.msra.mxu0 %v515
    %563 = vmatprep.subr.mxu0 %v520
    %564 = vmatpush1.msra.mxu0 %v519
    %565 = vmatprep.subr.mxu0 %v524
    %566 = vmatpush1.msra.mxu0 %v523
    %567 = vmatprep.subr.mxu0 %v528
    %568 = vmatpush1.msra.mxu0 %v527
    %569 = vmatprep.subr.mxu0 %v532
    %570 = vmatpush1.msra.mxu0 %v531
    %571 = vmatprep.subr.mxu0 %v536
    %572 = vmatpush1.msra.mxu0 %v535
    %573 = vmatprep.subr.mxu0 %v540
    %574 = vmatpush1.msra.mxu0 %v539
    %575 = vmatprep.subr.mxu0 0.0
    %576 = vmatpush1.msra.mxu0 0.0
    %577 = vmatprep.subr.mxu0 0.0
    %578 = vmatpush1.msra.mxu0 0.0
    %579 = vmatprep.subr.mxu0 0.0
    %580 = vmatpush1.msra.mxu0 0.0
    %581 = vmatprep.subr.mxu0 0.0
    %582 = vmatpush1.msra.mxu0 0.0
    %583 = vmatprep.subr.mxu0 0.0
    %584 = vmatpush1.msra.mxu0 0.0
    %585 = vmatprep.subr.mxu0 0.0
    %586 = vmatpush1.msra.mxu0 0.0
    %587 = vmatprep.subr.mxu0 0.0
    %588 = vmatpush1.msra.mxu0 0.0
    %589 = vmatprep.subr.mxu0 0.0
    %590 = vmatpush1.msra.mxu0 0.0
    %591 = vmatprep.subr.mxu0 0.0
    %592 = vmatpush1.msra.mxu0 0.0
    %593 = vmatprep.subr.mxu0 0.0
    %594 = vmatpush1.msra.mxu0 0.0
    %595 = vmatprep.subr.mxu0 0.0
    %596 = vmatpush1.msra.mxu0 0.0
    %597 = vmatprep.subr.mxu0 0.0
    %598 = vmatpush1.msra.mxu0 0.0
    %599 = vmatprep.subr.mxu0 0.0
    %600 = vmatpush1.msra.mxu0 0.0
    %601 = vmatprep.subr.mxu0 0.0
    %602 = vmatpush1.msra.mxu0 0.0
    %603 = vmatprep.subr.mxu0 0.0
    %604 = vmatpush1.msra.mxu0 0.0
    %605 = vmatprep.subr.mxu0 0.0
    %606 = vmatpush1.msra.mxu0 0.0
    %607 = vmatprep.mubr.f32.mxu0 0.0
    %608 = vmatmul.mubr.f32.gmra.mrb[0].mxu0 %v478
    %v609 = vpop.f32.mrb[0].mxu0
    %v610 = vadd.f32 0.0, %v609
    %v611 = vpop.f32.mrb[0].mxu0
    %v612 = vadd.f32 0.0, %v611
    %613 = vdwg.mxu0
    %614 = vmatprep.subr.mxu0 %v482
    %615 = vmatpush1.msra.mxu0 %v481
    %616 = vmatprep.subr.mxu0 %v486
    %617 = vmatpush1.msra.mxu0 %v485
    %618 = vmatprep.subr.mxu0 %v490
    %619 = vmatpush1.msra.mxu0 %v489
    %620 = vmatprep.subr.mxu0 %v494
    %621 = vmatpush1.msra.mxu0 %v493
    %622 = vmatprep.subr.mxu0 %v498
    %623 = vmatpush1.msra.mxu0 %v497
    %624 = vmatprep.subr.mxu0 %v502
    %625 = vmatpush1.msra.mxu0 %v501
    %626 = vmatprep.subr.mxu0 %v506
    %627 = vmatpush1.msra.mxu0 %v505
    %628 = vmatprep.subr.mxu0 %v510
    %629 = vmatpush1.msra.mxu0 %v509
    %630 = vmatprep.subr.mxu0 %v514
    %631 = vmatpush1.msra.mxu0 %v513
    %632 = vmatprep.subr.mxu0 %v518
    %633 = vmatpush1.msra.mxu0 %v517
    %634 = vmatprep.subr.mxu0 %v522
    %635 = vmatpush1.msra.mxu0 %v521
    %636 = vmatprep.subr.mxu0 %v526
    %637 = vmatpush1.msra.mxu0 %v525
    %638 = vmatprep.subr.mxu0 %v530
    %639 = vmatpush1.msra.mxu0 %v529
    %640 = vmatprep.subr.mxu0 %v534
    %641 = vmatpush1.msra.mxu0 %v533
    %642 = vmatprep.subr.mxu0 %v538
    %643 = vmatpush1.msra.mxu0 %v537
    %644 = vmatprep.subr.mxu0 %v542
    %645 = vmatpush1.msra.mxu0 %v541
    %646 = vmatprep.subr.mxu0 0.0
    %647 = vmatpush1.msra.mxu0 0.0
    %648 = vmatprep.subr.mxu0 0.0
    %649 = vmatpush1.msra.mxu0 0.0
    %650 = vmatprep.subr.mxu0 0.0
    %651 = vmatpush1.msra.mxu0 0.0
    %652 = vmatprep.subr.mxu0 0.0
    %653 = vmatpush1.msra.mxu0 0.0
    %654 = vmatprep.subr.mxu0 0.0
    %655 = vmatpush1.msra.mxu0 0.0
    %656 = vmatprep.subr.mxu0 0.0
    %657 = vmatpush1.msra.mxu0 0.0
    %658 = vmatprep.subr.mxu0 0.0
    %659 = vmatpush1.msra.mxu0 0.0
    %660 = vmatprep.subr.mxu0 0.0
    %661 = vmatpush1.msra.mxu0 0.0
    %662 = vmatprep.subr.mxu0 0.0
    %663 = vmatpush1.msra.mxu0 0.0
    %664 = vmatprep.subr.mxu0 0.0
    %665 = vmatpush1.msra.mxu0 0.0
    %666 = vmatprep.subr.mxu0 0.0
    %667 = vmatpush1.msra.mxu0 0.0
    %668 = vmatprep.subr.mxu0 0.0
    %669 = vmatpush1.msra.mxu0 0.0
    %670 = vmatprep.subr.mxu0 0.0
    %671 = vmatpush1.msra.mxu0 0.0
    %672 = vmatprep.subr.mxu0 0.0
    %673 = vmatpush1.msra.mxu0 0.0
    %674 = vmatprep.subr.mxu0 0.0
    %675 = vmatpush1.msra.mxu0 0.0
    %676 = vmatprep.subr.mxu0 0.0
    %677 = vmatpush1.msra.mxu0 0.0
    %678 = vmatprep.mubr.f32.mxu0 0.0
    %679 = vmatmul.mubr.f32.gmra.mrb[0].mxu0 %v478
    %v680 = vpop.f32.mrb[0].mxu0
    %v681 = vadd.f32 0.0, %v680
    %v682 = vpop.f32.mrb[0].mxu0
    %v683 = vadd.f32 0.0, %v682
    %684 = vdwg.mxu0
    %685 = vmatprep.subr.mxu0 %v351
    %686 = vmatpush1.msra.mxu0 %v350
    %687 = vmatprep.subr.mxu0 %v355
    %688 = vmatpush1.msra.mxu0 %v354
    %689 = vmatprep.subr.mxu0 %v359
    %690 = vmatpush1.msra.mxu0 %v358
    %691 = vmatprep.subr.mxu0 %v363
    %692 = vmatpush1.msra.mxu0 %v362
    %693 = vmatprep.subr.mxu0 %v367
    %694 = vmatpush1.msra.mxu0 %v366
    %695 = vmatprep.subr.mxu0 %v371
    %696 = vmatpush1.msra.mxu0 %v370
    %697 = vmatprep.subr.mxu0 %v375
    %698 = vmatpush1.msra.mxu0 %v374
    %699 = vmatprep.subr.mxu0 %v379
    %700 = vmatpush1.msra.mxu0 %v378
    %701 = vmatprep.subr.mxu0 %v383
    %702 = vmatpush1.msra.mxu0 %v382
    %703 = vmatprep.subr.mxu0 %v387
    %704 = vmatpush1.msra.mxu0 %v386
    %705 = vmatprep.subr.mxu0 %v391
    %706 = vmatpush1.msra.mxu0 %v390
    %707 = vmatprep.subr.mxu0 %v395
    %708 = vmatpush1.msra.mxu0 %v394
    %709 = vmatprep.subr.mxu0 %v399
    %710 = vmatpush1.msra.mxu0 %v398
    %711 = vmatprep.subr.mxu0 %v403
    %712 = vmatpush1.msra.mxu0 %v402
    %713 = vmatprep.subr.mxu0 %v407
    %714 = vmatpush1.msra.mxu0 %v406
    %715 = vmatprep.subr.mxu0 %v411
    %716 = vmatpush1.msra.mxu0 %v410
    %717 = vmatprep.subr.mxu0 %v415
    %718 = vmatpush1.msra.mxu0 %v414
    %719 = vmatprep.subr.mxu0 %v419
    %720 = vmatpush1.msra.mxu0 %v418
    %721 = vmatprep.subr.mxu0 %v423
    %722 = vmatpush1.msra.mxu0 %v422
    %723 = vmatprep.subr.mxu0 %v427
    %724 = vmatpush1.msra.mxu0 %v426
    %725 = vmatprep.subr.mxu0 %v431
    %726 = vmatpush1.msra.mxu0 %v430
    %727 = vmatprep.subr.mxu0 %v435
    %728 = vmatpush1.msra.mxu0 %v434
    %729 = vmatprep.subr.mxu0 %v439
    %730 = vmatpush1.msra.mxu0 %v438
    %731 = vmatprep.subr.mxu0 %v443
    %732 = vmatpush1.msra.mxu0 %v442
    %733 = vmatprep.subr.mxu0 %v447
    %734 = vmatpush1.msra.mxu0 %v446
    %735 = vmatprep.subr.mxu0 %v451
    %736 = vmatpush1.msra.mxu0 %v450
    %737 = vmatprep.subr.mxu0 %v455
    %738 = vmatpush1.msra.mxu0 %v454
    %739 = vmatprep.subr.mxu0 %v459
    %740 = vmatpush1.msra.mxu0 %v458
    %741 = vmatprep.subr.mxu0 %v463
    %742 = vmatpush1.msra.mxu0 %v462
    %743 = vmatprep.subr.mxu0 %v467
    %744 = vmatpush1.msra.mxu0 %v466
    %745 = vmatprep.subr.mxu0 %v471
    %746 = vmatpush1.msra.mxu0 %v470
    %747 = vmatprep.subr.mxu0 %v475
    %748 = vmatpush1.msra.mxu0 %v474
    %749 = vmatprep.mubr.f32.mxu0 %v349
    %750 = vmatmul.mubr.f32.gmra.mrb[0].mxu0 %v348
    %v751 = vpop.f32.mrb[0].mxu0
    %v752 = vadd.f32 %v610, %v751
    %v753 = vpop.f32.mrb[0].mxu0
    %v754 = vadd.f32 %v612, %v753
    %755 = vdwg.mxu0
    %756 = vmatprep.subr.mxu0 %v353
    %757 = vmatpush1.msra.mxu0 %v352
    %758 = vmatprep.subr.mxu0 %v357
    %759 = vmatpush1.msra.mxu0 %v356
    %760 = vmatprep.subr.mxu0 %v361
    %761 = vmatpush1.msra.mxu0 %v360
    %762 = vmatprep.subr.mxu0 %v365
    %763 = vmatpush1.msra.mxu0 %v364
    %764 = vmatprep.subr.mxu0 %v369
    %765 = vmatpush1.msra.mxu0 %v368
    %766 = vmatprep.subr.mxu0 %v373
    %767 = vmatpush1.msra.mxu0 %v372
    %768 = vmatprep.subr.mxu0 %v377
    %769 = vmatpush1.msra.mxu0 %v376
    %770 = vmatprep.subr.mxu0 %v381
    %771 = vmatpush1.msra.mxu0 %v380
    %772 = vmatprep.subr.mxu0 %v385
    %773 = vmatpush1.msra.mxu0 %v384
    %774 = vmatprep.subr.mxu0 %v389
    %775 = vmatpush1.msra.mxu0 %v388
    %776 = vmatprep.subr.mxu0 %v393
    %777 = vmatpush1.msra.mxu0 %v392
    %778 = vmatprep.subr.mxu0 %v397
    %779 = vmatpush1.msra.mxu0 %v396
    %780 = vmatprep.subr.mxu0 %v401
    %781 = vmatpush1.msra.mxu0 %v400
    %782 = vmatprep.subr.mxu0 %v405
    %783 = vmatpush1.msra.mxu0 %v404
    %784 = vmatprep.subr.mxu0 %v409
    %785 = vmatpush1.msra.mxu0 %v408
    %786 = vmatprep.subr.mxu0 %v413
    %787 = vmatpush1.msra.mxu0 %v412
    %788 = vmatprep.subr.mxu0 %v417
    %789 = vmatpush1.msra.mxu0 %v416
    %790 = vmatprep.subr.mxu0 %v421
    %791 = vmatpush1.msra.mxu0 %v420
    %792 = vmatprep.subr.mxu0 %v425
    %793 = vmatpush1.msra.mxu0 %v424
    %794 = vmatprep.subr.mxu0 %v429
    %795 = vmatpush1.msra.mxu0 %v428
    %796 = vmatprep.subr.mxu0 %v433
    %797 = vmatpush1.msra.mxu0 %v432
    %798 = vmatprep.subr.mxu0 %v437
    %799 = vmatpush1.msra.mxu0 %v436
    %800 = vmatprep.subr.mxu0 %v441
    %801 = vmatpush1.msra.mxu0 %v440
    %802 = vmatprep.subr.mxu0 %v445
    %803 = vmatpush1.msra.mxu0 %v444
    %804 = vmatprep.subr.mxu0 %v449
    %805 = vmatpush1.msra.mxu0 %v448
    %806 = vmatprep.subr.mxu0 %v453
    %807 = vmatpush1.msra.mxu0 %v452
    %808 = vmatprep.subr.mxu0 %v457
    %809 = vmatpush1.msra.mxu0 %v456
    %810 = vmatprep.subr.mxu0 %v461
    %811 = vmatpush1.msra.mxu0 %v460
    %812 = vmatprep.subr.mxu0 %v465
    %813 = vmatpush1.msra.mxu0 %v464
    %814 = vmatprep.subr.mxu0 %v469
    %815 = vmatpush1.msra.mxu0 %v468
    %816 = vmatprep.subr.mxu0 %v473
    %817 = vmatpush1.msra.mxu0 %v472
    %818 = vmatprep.subr.mxu0 %v477
    %819 = vmatpush1.msra.mxu0 %v476
    %820 = vmatprep.mubr.f32.mxu0 %v349
    %821 = vmatmul.mubr.f32.gmra.mrb[0].mxu0 %v348
    %v822 = vpop.f32.mrb[0].mxu0
    %v823 = vadd.f32 %v681, %v822
    %v824 = vpop.f32.mrb[0].mxu0
    %v825 = vadd.f32 %v683, %v824
    %826 = vdwg.mxu0
    %v827 = vld [vmem:[%s7] sm:$0xf]
    %v829 = vlaneseq
    %v830 = vshrl.u32 %v829, 7
    %v831 = vsub.s32 0, %v830
    %v832 = vrot.slane %v827, %v831
    %v833 = vlaneseq
    %v834 = vshrl.u32 %v833, 7
    %v835 = vsub.s32 1, %v834
    %v836 = vrot.slane %v827, %v835
    %v837 = vlaneseq
    %v838 = vshrl.u32 %v837, 7
    %v839 = vsub.s32 2, %v838
    %v840 = vrot.slane %v827, %v839
    %v841 = vlaneseq
    %v842 = vshrl.u32 %v841, 7
    %v843 = vsub.s32 3, %v842
    %v844 = vrot.slane %v827, %v843
    %v849 = vadd.f32 %v752, %v832
    %v850 = vadd.f32 %v754, %v836
    %v851 = vadd.f32 %v823, %v840
    %v852 = vadd.f32 %v825, %v844
    %v853 = vxor.u32 %v849, 2147483648
    %v854 = vmul.f32 %v853, 1.442695
    %v855 = vpow.pop %v854
    %v856 = vadd.f32 %v855, 1.0
    %v857 = vrcp.pop %v856
    %v858 = vmul.f32 1.0, %v857
    %v859 = vxor.u32 %v850, 2147483648
    %v860 = vmul.f32 %v859, 1.442695
    %v861 = vpow.pop %v860
    %v862 = vadd.f32 %v861, 1.0
    %v863 = vrcp.pop %v862
    %v864 = vmul.f32 1.0, %v863
    %v865 = vtanh.pop %v851
    %v866 = vxor.u32 %v852, 2147483648
    %v867 = vmul.f32 %v866, 1.442695
    %v868 = vpow.pop %v867
    %v869 = vadd.f32 %v868, 1.0
    %v870 = vrcp.pop %v869
    %v871 = vmul.f32 1.0, %v870
    %v872 = vld [vmem:[%s2] sm:$0xff]
    %v873 = vmul.f32 %v864, %v872
    %v874 = vmul.f32 %v858, %v865
    %v875 = vadd.f32 %v873, %v874
    %v876 = vtanh.pop %v875
    %v877 = vmul.f32 %v871, %v876
    %878 = vst [vmem:[#allocation11] sm:$0xff] %v875
    %879 = vst [vmem:[#allocation10] sm:$0xff] %v877
    %v880 = vld [vmem:[#allocation8] sm:$0xff]
    %v881 = vld [vmem:[#allocation8 + $0x8] sm:$0xff]
    %v882 = vld [vmem:[#allocation8 + $0x10] sm:$0xff]
    %v883 = vld [vmem:[#allocation8 + $0x18] sm:$0xff]
    %v884 = vld [vmem:[#allocation8 + $0x20] sm:$0xff]
    %v885 = vld [vmem:[#allocation8 + $0x28] sm:$0xff]
    %v886 = vld [vmem:[#allocation8 + $0x30] sm:$0xff]
    %v887 = vld [vmem:[#allocation8 + $0x38] sm:$0xff]
    %v888 = vld [vmem:[#allocation8 + $0x40] sm:$0xff]
    %v889 = vld [vmem:[#allocation8 + $0x48] sm:$0xff]
    %v890 = vld [vmem:[#allocation8 + $0x50] sm:$0xff]
    %v891 = vld [vmem:[#allocation8 + $0x58] sm:$0xff]
    %v892 = vld [vmem:[#allocation8 + $0x60] sm:$0xff]
    %v893 = vld [vmem:[#allocation8 + $0x68] sm:$0xff]
    %v894 = vld [vmem:[#allocation8 + $0x70] sm:$0xff]
    %v895 = vld [vmem:[#allocation8 + $0x78] sm:$0xff]
    %v896 = vld [vmem:[%s9] sm:$0x1]
    %v898 = vlaneseq
    %v899 = vshrl.u32 %v898, 7
    %v900 = vsub.s32 0, %v899
    %v901 = vrot.slane %v896, %v900
    %903 = vmatprep.subr.mxu0 0.0
    %904 = vmatpush1.msra.mxu0 %v880
    %905 = vmatprep.subr.mxu0 0.0
    %906 = vmatpush1.msra.mxu0 %v881
    %907 = vmatprep.subr.mxu0 0.0
    %908 = vmatpush1.msra.mxu0 %v882
    %909 = vmatprep.subr.mxu0 0.0
    %910 = vmatpush1.msra.mxu0 %v883
    %911 = vmatprep.subr.mxu0 0.0
    %912 = vmatpush1.msra.mxu0 %v884
    %913 = vmatprep.subr.mxu0 0.0
    %914 = vmatpush1.msra.mxu0 %v885
    %915 = vmatprep.subr.mxu0 0.0
    %916 = vmatpush1.msra.mxu0 %v886
    %917 = vmatprep.subr.mxu0 0.0
    %918 = vmatpush1.msra.mxu0 %v887
    %919 = vmatprep.subr.mxu0 0.0
    %920 = vmatpush1.msra.mxu0 %v888
    %921 = vmatprep.subr.mxu0 0.0
    %922 = vmatpush1.msra.mxu0 %v889
    %923 = vmatprep.subr.mxu0 0.0
    %924 = vmatpush1.msra.mxu0 %v890
    %925 = vmatprep.subr.mxu0 0.0
    %926 = vmatpush1.msra.mxu0 %v891
    %927 = vmatprep.subr.mxu0 0.0
    %928 = vmatpush1.msra.mxu0 %v892
    %929 = vmatprep.subr.mxu0 0.0
    %930 = vmatpush1.msra.mxu0 %v893
    %931 = vmatprep.subr.mxu0 0.0
    %932 = vmatpush1.msra.mxu0 %v894
    %933 = vmatprep.subr.mxu0 0.0
    %934 = vmatpush1.msra.mxu0 %v895
    %935 = vmatprep.subr.mxu0 0.0
    %936 = vmatpush1.msra.mxu0 0.0
    %937 = vmatprep.subr.mxu0 0.0
    %938 = vmatpush1.msra.mxu0 0.0
    %939 = vmatprep.subr.mxu0 0.0
    %940 = vmatpush1.msra.mxu0 0.0
    %941 = vmatprep.subr.mxu0 0.0
    %942 = vmatpush1.msra.mxu0 0.0
    %943 = vmatprep.subr.mxu0 0.0
    %944 = vmatpush1.msra.mxu0 0.0
    %945 = vmatprep.subr.mxu0 0.0
    %946 = vmatpush1.msra.mxu0 0.0
    %947 = vmatprep.subr.mxu0 0.0
    %948 = vmatpush1.msra.mxu0 0.0
    %949 = vmatprep.subr.mxu0 0.0
    %950 = vmatpush1.msra.mxu0 0.0
    %951 = vmatprep.subr.mxu0 0.0
    %952 = vmatpush1.msra.mxu0 0.0
    %953 = vmatprep.subr.mxu0 0.0
    %954 = vmatpush1.msra.mxu0 0.0
    %955 = vmatprep.subr.mxu0 0.0
    %956 = vmatpush1.msra.mxu0 0.0
    %957 = vmatprep.subr.mxu0 0.0
    %958 = vmatpush1.msra.mxu0 0.0
    %959 = vmatprep.subr.mxu0 0.0
    %960 = vmatpush1.msra.mxu0 0.0
    %961 = vmatprep.subr.mxu0 0.0
    %962 = vmatpush1.msra.mxu0 0.0
    %963 = vmatprep.subr.mxu0 0.0
    %964 = vmatpush1.msra.mxu0 0.0
    %965 = vmatprep.subr.mxu0 0.0
    %966 = vmatpush1.msra.mxu0 0.0
    %967 = vmatprep.mubr.f32.mxu0 0.0
    %968 = vmatmul.mubr.f32.gmra.mrb[0].mxu0 %v877
    %v969 = vpop.f32.mrb[0].mxu0
    %v970 = vadd.f32 %v901, %v969
    %v971 = vpop.f32.mrb[0].mxu0
    %972 = vdwg.mxu0
    %973 = vst [vmem:[%s10] sm:$0xff] %v970
    // Predicated region
    $region58: #{fclstm_forward.1} parent=1 // pred_check
      _
    $region59: #{fclstm_forward.1} parent=1 // pred_check_branch
      %975 = sbr.rel (0) target = $region61
    $region60: #{fclstm_forward.1} parent=1 // pred_region
      _
    $region61: #{fclstm_forward.1} parent=1 // pred_fallthru
      _
    // Predicated region
    $region62: #{fclstm_forward.1} parent=1 // pred_check
      _
    $region63: #{fclstm_forward.1} parent=1 // pred_check_branch
      %977 = sbr.rel (0) target = $region65
    $region64: #{fclstm_forward.1} parent=1 // pred_region
      %s979 = ssub.s32 128, 128
      %980 = vsyncadd [#allocation4], %s979
      %s982 = sshll.u32 [#allocation10], 4
      %s983 = int_to_ptr.vmem [resolvable:$true] %s982
      %985 = dma.vmem_to_hbm [thread:$0]  %s983, 128, %s11, [#allocation4]
    $region65: #{fclstm_forward.1} parent=1 // pred_fallthru
      _
    // Predicated region
    $region66: #{fclstm_forward.1} parent=1 // pred_check
      _
    $region67: #{fclstm_forward.1} parent=1 // pred_check_branch
      %987 = sbr.rel (0) target = $region69
    $region68: #{fclstm_forward.1} parent=1 // pred_region
      %s989 = ssub.s32 128, 128
      %990 = vsyncadd [#allocation12], %s989
      %s992 = sshll.u32 [#allocation11], 4
      %s993 = int_to_ptr.vmem [resolvable:$true] %s992
      %995 = dma.vmem_to_hbm [thread:$0]  %s993, 128, %s12, [#allocation12]
    $region69: #{fclstm_forward.1} parent=1 // pred_fallthru
      _
    // Predicated region
    $region70: #{fclstm_forward.1} parent=1 // pred_check
      _
    $region71: #{fclstm_forward.1} parent=1 // pred_check_branch
      %997 = sbr.rel (0) target = $region73
    $region72: #{fclstm_forward.1} parent=1 // pred_region
      _
    $region73: #{fclstm_forward.1} parent=1 // pred_fallthru
      _
    // Predicated region
    $region74: #{fclstm_forward.1} parent=1 // pred_check
      _
    $region75: #{fclstm_forward.1} parent=1 // pred_check_branch
      %999 = sbr.rel (0) target = $region77
    $region76: #{fclstm_forward.1} parent=1 // pred_region
      %1000 = dma.done [#allocation4], 128
    $region77: #{fclstm_forward.1} parent=1 // pred_fallthru
      _
    // Predicated region
    $region78: #{fclstm_forward.1} parent=1 // pred_check
      _
    $region79: #{fclstm_forward.1} parent=1 // pred_check_branch
      %1002 = sbr.rel (0) target = $region81
    $region80: #{fclstm_forward.1} parent=1 // pred_region
      %1003 = dma.done [#allocation12], 128
    $region81: #{fclstm_forward.1} parent=1 // pred_fallthru
      _
    %1004 = vsyncpa [#allocation3], 1
    %1005 = vsyncpa [#allocation6], 1
    %1006 = vsyncpa [#allocation9], 1
    %1007 = vsyncpa [#allocation4], 1
    %1008 = vsyncpa [#allocation12], 1

</llo_original>
